<compile_context>
chip_gen: v5e
topology: v5e:2x2
jax: 0.10.0
libtpu: 0.0.40
codegen_flags: <defaults>
</compile_context>

<pallas_src>
import functools

import numpy as np

import jax
import jax.numpy as jnp
from jax.experimental import pallas as pl
from jax.experimental.pallas import tpu as pltpu

_OFF = 128          # lane offset of spatial position (0, 0) inside the canvas
_CANVAS = 1024      # 128-margin + 28*28 active + margin, multiple of 128

# Tap shifts (lane deltas) for 3x3 convs; k = 3*i + j ordering matches weight packing.
_S1 = tuple(28 * i + j for i in range(3) for j in range(3))               # stride-1 canvas
_S2 = tuple(2 * (28 * i + j) for i in range(3) for j in range(3))         # stride-2 canvas
_S2P = tuple(2 * (28 * (i - 1) + (j - 1)) for i in range(3) for j in range(3))  # pad=1


def _np_mask(hv, wv, stride):
    c = np.arange(_CANVAS)
    r = c - _OFF
    h, w = r // 28, r % 28
    ok = ((r >= 0) & (r < 784)
          & (h % stride == 0) & (w % stride == 0)
          & (h // stride < hv) & (w // stride < wv))
    return ok.astype(np.float32)


# Valid-region masks: conv1, conv2, pool, conv3, conv4, conv5, conv6, (unused).
_MASKS = np.stack([
    _np_mask(26, 26, 1), _np_mask(24, 24, 1), _np_mask(12, 12, 2), _np_mask(10, 10, 2),
    _np_mask(8, 8, 2), _np_mask(6, 6, 2), _np_mask(6, 6, 2),
    np.zeros(_CANVAS, np.float32),
])


@functools.cache
def _roll_matches_np():
    # One-off probe of pltpu.roll's direction (True -> same as jnp.roll, i.e. element i
    # moves to i+shift).  Keeps the conv tap shifts correct across Mosaic versions.
    with jax.ensure_compile_time_eval():
        x = jnp.arange(8 * 128, dtype=jnp.float32).reshape(8, 128)

        def k(x_ref, o_ref):
            o_ref[...] = pltpu.roll(x_ref[...], 1, 1)

        y = pl.pallas_call(k, out_shape=jax.ShapeDtypeStruct((8, 128), jnp.float32))(x)
        return bool(y[0, 1] == x[0, 0])


# ------------------------------- fused kernel -------------------------------

def _net2_kernel(x_ref, w_ref, w8_ref, b_ref, m_ref, o_ref, *, roll_np):
    # x_ref : (1, 16, 1024)  per-sample canvas (channels on sublanes, space on lanes)
    # w_ref : (864, 16)      packed conv weights: rows [layer*144 + 16*k + co], cols = ci
    # w8_ref: (16, 16)       transposed 1x1 head weight (rows >= 10 are zero)
    # b_ref : (128, 1)       packed biases: rows [16*layer + co]; head pad rows = -1e30
    # m_ref : (8, 1024)      per-stage valid-region masks
    # o_ref : (1, 16, 1)     per-sample log-prob column (first 10 rows valid)

    def shifted(x, s):
        # out[:, c] = x[:, c + s]  (wrap lands only in masked/margin columns)
        amt = (-s) % _CANVAS if roll_np else s % _CANVAS
        return x if amt == 0 else pltpu.roll(x, amt, 1)

    def conv(x, layer, mask_idx, shifts, relu):
        acc = None
        for k, s in enumerate(shifts):
            a = w_ref[pl.ds(layer * 144 + 16 * k, 16), :]          # (16, 16)  A[co, ci]
            t = jnp.dot(a, shifted(x, s), preferred_element_type=jnp.float32)
            acc = t if acc is None else acc + t
        acc = acc + b_ref[pl.ds(16 * layer, 16), :]                # (16, 1) bias
        if relu:
            acc = jnp.maximum(acc, 0.0)
        return acc * m_ref[pl.ds(mask_idx, 1), :]                  # zero outside valid region

    x = x_ref[0]                                                   # (16, 1024)

    x = conv(x, 0, 0, _S1, True)                                   # conv1 + relu  (26x26)
    x = conv(x, 1, 1, _S1, True)                                   # conv2 + relu  (24x24)

    p = x                                                          # maxpool 2x2 -> 12x12
    for s in (1, 28, 29):
        p = jnp.maximum(p, shifted(x, s))
    x = p * m_ref[pl.ds(2, 1), :]

    x = conv(x, 2, 3, _S2, True)                                   # conv3 (+bn1 folded)
    x = conv(x, 3, 4, _S2, True)                                   # conv4 + relu
    x = conv(x, 4, 5, _S2, True)                                   # conv5 (+bn2 folded)
    x = conv(x, 5, 6, _S2P, False)                                 # conv6 (pad=1), no relu

    gap = jnp.sum(x, axis=1, keepdims=True) * (1.0 / 36.0)         # (16, 1) AvgPool2d(6)
    logits = jnp.dot(w8_ref[...], gap, preferred_element_type=jnp.float32)
    logits = logits + b_ref[pl.ds(96, 16), :]                      # head bias (pads = -1e30)
    mx = jnp.max(logits, axis=0, keepdims=True)
    sh = logits - mx
    lse = jnp.log(jnp.sum(jnp.exp(sh), axis=0, keepdims=True))
    o_ref[0] = sh - lse                                            # (16, 1) log-probs


# ------------------------------ weight packing ------------------------------

def _bn_scale_shift(gamma, beta, mean, var, eps=1e-5):
    scale = gamma / jnp.sqrt(var + eps)
    shift = beta - mean * scale
    return scale, shift


def _fold_bn_into_next_conv(w, b, scale, shift):
    # conv(bn(x)) == conv'(x): per-input-channel scale into weights, shift into bias.
    w_eff = w * scale[None, None, :, None]
    b_eff = b + jnp.sum(w * shift[None, None, :, None], axis=(0, 1, 2))
    return w_eff, b_eff


def _pack_tap_weights(w_eff):
    # (3, 3, cin, cout) -> (144, 16): rows 16*k + co hold w_eff[i, j, :, co], padded to 16.
    kh, kw, cin, cout = w_eff.shape
    a = jnp.zeros((kh * kw, 16, 16), jnp.float32)
    a = a.at[:, :cout, :cin].set(
        jnp.transpose(w_eff, (0, 1, 3, 2)).reshape(kh * kw, cout, cin))
    return a.reshape(kh * kw * 16, 16)


# --------------------------------- forward ----------------------------------

def net2_forward(params, x_nchw):
    p = params
    n = x_nchw.shape[0]

    scale1, shift1 = _bn_scale_shift(p["bn1_gamma"], p["bn1_beta"], p["bn1_mean"], p["bn1_var"])
    scale2, shift2 = _bn_scale_shift(p["bn2_gamma"], p["bn2_beta"], p["bn2_mean"], p["bn2_var"])
    w3f, b3f = _fold_bn_into_next_conv(p["w3"], p["b3"], scale1, shift1)   # bn1 -> conv3
    w5f, b5f = _fold_bn_into_next_conv(p["w5"], p["b5"], scale2, shift2)   # bn2 -> conv5

    layers = [(p["w1"], p["b1"]), (p["w2"], p["b2"]), (w3f, b3f),
              (p["w4"], p["b4"]), (w5f, b5f), (p["w6"], p["b6"])]

    w_all = jnp.concatenate([_pack_tap_weights(w) for w, _ in layers], axis=0)  # (864, 16)

    bcols = jnp.zeros((8, 16), jnp.float32)
    for l, (_, b) in enumerate(layers):
        bcols = bcols.at[l, : b.shape[0]].set(b)
    bcols = bcols.at[6, :10].set(p["b8"]).at[6, 10:].set(-1e30)     # head bias (+pad=-inf)
    b_all = bcols.reshape(128, 1)

    w8t = jnp.zeros((16, 16), jnp.float32).at[:10, :].set(p["w8"].reshape(16, 10).T)
    masks = jnp.asarray(_MASKS)                                     # (8, 1024)

    # Input canvas (the NCHW->layout transform is absorbed here; C == 1 so it is free).
    canvas = jnp.zeros((n, 16, _CANVAS), jnp.float32)
    canvas = canvas.at[:, 0, _OFF:_OFF + 784].set(
        x_nchw[:, 0].astype(jnp.float32).reshape(n, 784))

    kernel = functools.partial(_net2_kernel, roll_np=_roll_matches_np())
    out3 = pl.pallas_call(
        kernel,
        out_shape=jax.ShapeDtypeStruct((n, 16, 1), jnp.float32),
        grid=(n,),
        in_specs=[
            pl.BlockSpec((1, 16, _CANVAS), lambda i: (i, 0, 0)),    # per-sample canvas
            pl.BlockSpec((864, 16), lambda i: (0, 0)),              # packed conv weights
            pl.BlockSpec((16, 16), lambda i: (0, 0)),               # 1x1 head weight (T)
            pl.BlockSpec((128, 1), lambda i: (0, 0)),               # packed biases
            pl.BlockSpec((8, _CANVAS), lambda i: (0, 0)),           # valid-region masks
        ],
        out_specs=pl.BlockSpec((1, 16, 1), lambda i: (i, 0, 0)),
        compiler_params=pltpu.CompilerParams(
            dimension_semantics=("parallel",)),
    )(canvas, w_all, w8t, b_all, masks)

    return out3[:, :10, 0]                                          # (N, 10) log-probs


# ------------------------------- parameters ---------------------------------

def init_params(key):
    ks = jax.random.split(key, 24)

    def conv_w(k, kh, kw, cin, cout):
        fan_in = kh * kw * cin
        return (jax.random.normal(k, (kh, kw, cin, cout), jnp.float32)
                / jnp.sqrt(float(fan_in)))

    def bias(k, cout):
        return 0.01 * jax.random.normal(k, (cout,), jnp.float32)

    p = {}
    p["w1"], p["b1"] = conv_w(ks[0], 3, 3, 1, 16), bias(ks[1], 16)
    p["w2"], p["b2"] = conv_w(ks[2], 3, 3, 16, 10), bias(ks[3], 10)
    p["w3"], p["b3"] = conv_w(ks[4], 3, 3, 10, 10), bias(ks[5], 10)
    p["w4"], p["b4"] = conv_w(ks[6], 3, 3, 10, 16), bias(ks[7], 16)
    p["w5"], p["b5"] = conv_w(ks[8], 3, 3, 16, 16), bias(ks[9], 16)
    p["w6"], p["b6"] = conv_w(ks[10], 3, 3, 16, 16), bias(ks[11], 16)
    p["w8"], p["b8"] = conv_w(ks[12], 1, 1, 16, 10), bias(ks[13], 10)
    p["bn1_gamma"] = 1.0 + 0.1 * jax.random.normal(ks[14], (10,), jnp.float32)
    p["bn1_beta"] = 0.1 * jax.random.normal(ks[15], (10,), jnp.float32)
    p["bn1_mean"] = 0.1 * jax.random.normal(ks[16], (10,), jnp.float32)
    p["bn1_var"] = 1.0 + 0.1 * jnp.abs(jax.random.normal(ks[17], (10,), jnp.float32))
    p["bn2_gamma"] = 1.0 + 0.1 * jax.random.normal(ks[18], (16,), jnp.float32)
    p["bn2_beta"] = 0.1 * jax.random.normal(ks[19], (16,), jnp.float32)
    p["bn2_mean"] = 0.1 * jax.random.normal(ks[20], (16,), jnp.float32)
    p["bn2_var"] = 1.0 + 0.1 * jnp.abs(jax.random.normal(ks[21], (16,), jnp.float32))
    return p


# --------------------------- pure-JAX reference -----------------------------

def _ref_forward(p, x_nchw):
    hi = jax.lax.Precision.HIGHEST

    def conv(x, w, b, pad=0):
        y = jax.lax.conv_general_dilated(
            x, w, window_strides=(1, 1), padding=[(pad, pad), (pad, pad)],
            dimension_numbers=("NHWC", "HWIO", "NHWC"), precision=hi)
        return y + b

    def bn(x, g, beta, m, v):
        return (x - m) * (g / jnp.sqrt(v + 1e-5)) + beta

    x = jnp.transpose(x_nchw, (0, 2, 3, 1)).astype(jnp.float32)
    x = jax.nn.relu(conv(x, p["w1"], p["b1"]))
    x = jax.nn.relu(conv(x, p["w2"], p["b2"]))
    n, h, w, c = x.shape
    x = x.reshape(n, h // 2, 2, w // 2, 2, c).max(axis=(2, 4))
    x = bn(x, p["bn1_gamma"], p["bn1_beta"], p["bn1_mean"], p["bn1_var"])
    x = jax.nn.relu(conv(x, p["w3"], p["b3"]))
    x = jax.nn.relu(conv(x, p["w4"], p["b4"]))
    x = bn(x, p["bn2_gamma"], p["bn2_beta"], p["bn2_mean"], p["bn2_var"])
    x = jax.nn.relu(conv(x, p["w5"], p["b5"]))
    x = conv(x, p["w6"], p["b6"], pad=1)
    g = jnp.mean(x, axis=(1, 2))
    logits = jnp.dot(g, p["w8"].reshape(16, 10), precision=hi) + p["b8"]
    return jax.nn.log_softmax(logits, axis=-1)


if __name__ == "__main__":
    key = jax.random.PRNGKey(0)
    pkey, xkey = jax.random.split(key)
    params = init_params(pkey)
    # Input implied by the architecture (GAP kernel 6 -> 28x28 single-channel).
    x = jax.random.normal(xkey, (2, 1, 28, 28), jnp.float32)

    _roll_matches_np()                      # warm the roll-direction probe (outside jit)

    out = jax.jit(net2_forward)(params, x)
    out = jax.block_until_ready(out)

    assert out.shape == (2, 10), out.shape
    assert bool(jnp.all(jnp.isfinite(out)))
    row_sums = jnp.exp(out).sum(axis=1)     # log_softmax rows must be distributions
    assert bool(jnp.allclose(row_sums, 1.0, atol=1e-4)), row_sums

    ref = _ref_forward(params, x)
    assert bool(jnp.allclose(out, ref, atol=5e-2, rtol=5e-2)), (out, ref)

    print("KERNEL_OK")
</pallas_src>

<mosaic_0001>
module attributes {stable_mosaic.version = 11 : i64} {
  func.func @k(%arg0: memref<8x128xf32, #tpu.memory_space<vmem>>, %arg1: memref<8x128xf32, #tpu.memory_space<vmem>>) attributes {dimension_semantics = [], scalar_prefetch = 0 : i64, scratch_operands = 0 : i64, tpu.core_type = #tpu.core_type<tc>} {
    %c0 = arith.constant 0 : index
    %c0_0 = arith.constant 0 : index
    %0 = vector.load %arg0[%c0, %c0_0] : memref<8x128xf32, #tpu.memory_space<vmem>>, vector<8x128xf32>
    %c1_i32 = arith.constant 1 : i32
    %1 = tpu.dynamic_rotate %0 by %c1_i32 dim 1 : vector<8x128xf32>, i32 -> vector<8x128xf32>
    %c0_1 = arith.constant 0 : index
    %c0_2 = arith.constant 0 : index
    %2 = vector.load %arg1[%c0_1, %c0_2] : memref<8x128xf32, #tpu.memory_space<vmem>>, vector<8x128xf32>
    tpu.vector_store %arg1[%c0_1, %c0_2], %1 {strides = array<i32>} : memref<8x128xf32, #tpu.memory_space<vmem>>, vector<8x128xf32>,
    return
  }
}

</mosaic_0001>

<llo_original>
// kernel: tpu_custom_call.1
$region0: #{tpu_custom_call.1}
  #allocation0 [shape = 'u32[]', space=smem, size = 0x4, offset = 0x4, fixed_abs, tag = 'smem constant byte address 0x4 - core index']
  #allocation1 [shape = 'u32[72,128]{1,0:T(1,128)}', space=vmem, size = 0x9000, scoped, tag = 'internal scratch']
  %s0 = inlined_call_operand.hbm [shape: f32[8,128], index: 0, kind: input, shape index: {}]
  %s1 = inlined_call_operand.hbm [shape: f32[8,128], index: 1, kind: output, shape index: {}]
  %s2 = sld [smem:[#allocation0]]
  $region18: #{tpu_custom_call.1} parent=0
    _
  %s4 = ssub.s32 1, %s2
  %s5 = scalar_select 0, %s4, %s2
  $region1: #{tpu_custom_call.1} parent=0
    #allocation2 [shape = 'u8[4096]{0}', space=vmem, size = 0x1000, scoped, tag = 'input window, operand 0, single buffered']
    #allocation3 [shape = 's32[1]{0}', space=sflag, size = 0x4, scoped, tag = 'scoped memory for tpu_custom_call.1']
    #allocation4 [shape = 's32[1]{0}', space=sflag, size = 0x4, scoped, tag = 'scoped memory for tpu_custom_call.1']
    #allocation5 [shape = 'u8[4096]{0}', space=vmem, size = 0x1000, scoped, tag = 'output window, operand 0, single buffered']
    %6 = vsyncpa [#allocation3], 0
    %7 = vsyncpa [#allocation4], 0
    // Predicated region
    $region2: #{tpu_custom_call.1} parent=1 // pred_check
      _
    $region3: #{tpu_custom_call.1} parent=1 // pred_check_branch
      %9 = sbr.rel (0) target = $region5
    $region4: #{tpu_custom_call.1} parent=1 // pred_region
      %11 = vsyncadd [#allocation3], 0
      %s13 = sshll.u32 %s0, 4
      %s14 = int_to_ptr.hbm [resolvable:$true] %s13
      %s15 = sshll.u32 [#allocation2], 4
      %s16 = int_to_ptr.vmem [resolvable:$true] %s15
      %18 = dma.hbm_to_vmem [thread:$0]  %s14, 128, %s16, [#allocation3]
    $region5: #{tpu_custom_call.1} parent=1 // pred_fallthru
      _
    // Predicated region
    $region6: #{tpu_custom_call.1} parent=1 // pred_check
      _
    $region7: #{tpu_custom_call.1} parent=1 // pred_check_branch
      %20 = sbr.rel (0) target = $region9
    $region8: #{tpu_custom_call.1} parent=1 // pred_region
      %22 = dma.done [#allocation3], 128
    $region9: #{tpu_custom_call.1} parent=1 // pred_fallthru
      _
    %v23 = vld [vmem:[#allocation2] sm:$0xff]
    %24 = vrot.lane.b32.xlu0 %v23, 1
    %v25 = vpop.permute.xlu0 %24
    %26 = vst [vmem:[#allocation5] sm:$0xff] %v25
    // Predicated region
    $region10: #{tpu_custom_call.1} parent=1 // pred_check
      _
    $region11: #{tpu_custom_call.1} parent=1 // pred_check_branch
      %28 = sbr.rel (0) target = $region13
    $region12: #{tpu_custom_call.1} parent=1 // pred_region
      %30 = vsyncadd [#allocation4], 0
      %s32 = sshll.u32 [#allocation5], 4
      %s33 = int_to_ptr.vmem [resolvable:$true] %s32
      %s34 = sshll.u32 %s1, 4
      %s35 = int_to_ptr.hbm [resolvable:$true] %s34
      %37 = dma.vmem_to_hbm [thread:$0]  %s33, 128, %s35, [#allocation4]
    $region13: #{tpu_custom_call.1} parent=1 // pred_fallthru
      _
    // Predicated region
    $region14: #{tpu_custom_call.1} parent=1 // pred_check
      _
    $region15: #{tpu_custom_call.1} parent=1 // pred_check_branch
      %39 = sbr.rel (0) target = $region17
    $region16: #{tpu_custom_call.1} parent=1 // pred_region
      %41 = dma.done [#allocation4], 128
    $region17: #{tpu_custom_call.1} parent=1 // pred_fallthru
      _
    %42 = vsyncpa [#allocation3], 1
    %43 = vsyncpa [#allocation4], 1

</llo_original>
